<compile_context>
chip_gen: v5e
topology: v5e:2x2
jax: 0.10.0
libtpu: 0.0.40
codegen_flags: <defaults>
</compile_context>

<pallas_src>
import math

import jax
import jax.numpy as jnp
from jax.experimental import pallas as pl
from jax.experimental.pallas import tpu as pltpu


# ----------------------------- Pallas kernel --------------------------------
def _pe_add_kernel(x_ref, pe_ref, o_ref):
    # x_ref : (TILE_ROWS, B*D)  lane-dense tile of the flattened [S, B*D] view
    # pe_ref: (1, B*D)          pe[y] rows, flattened; broadcasts across rows
    # o_ref : (TILE_ROWS, B*D)
    o_ref[...] = x_ref[...] + pe_ref[...]      # single VPU add per vreg
    # TODO(synk): training-mode dropout (p=0.1) intentionally omitted — eval-mode
    # nn.Dropout is the identity; a stochastic variant would use
    # pltpu.prng_seed + pltpu.prng_random_bits inside this kernel.


# --------------------------- parameter construction -------------------------
def make_positional_encoding_table(d_model: int, max_len: int = 5000,
                                   dtype=jnp.float32):
    """Deterministically build the `pe` buffer exactly like the module __init__.

    Returns pe of shape [max_len, d_model] (the middle singleton dim of the
    PyTorch buffer [max_len, 1, d_model] is squeezed away).
    """
    position = jnp.arange(max_len, dtype=jnp.float32)[:, None]          # (L, 1)
    div_term = jnp.exp(
        jnp.arange(0, d_model, 2, dtype=jnp.float32)
        * (-math.log(10000.0) / d_model))                               # (D/2,)
    pe = jnp.zeros((max_len, d_model), dtype=jnp.float32)
    pe = pe.at[:, 0::2].set(jnp.sin(position * div_term))
    pe = pe.at[:, 1::2].set(jnp.cos(position * div_term))
    return pe.astype(dtype)


# --------------------------------- wrapper -----------------------------------
def positional_encoding_forward(x, y, pe, *, target_block_bytes=1 << 20):
    """x: [S, B, D] float, y: [B] int indices, pe: [max_len, D]."""
    S, B, D = x.shape
    BD = B * D
    itemsize = jnp.dtype(x.dtype).itemsize

    # Glue (tiny, done once in JAX): gather the PE rows indexed by y and flatten
    # them to a lane-dense (1, B*D) slab that broadcasts over the sequence axis.
    pe_rows = jnp.take(pe, y.astype(jnp.int32), axis=0).astype(x.dtype)  # (B, D)
    pe_flat = pe_rows.reshape(1, BD)

    # Free reshape: [S, B, D] -> [S, B*D] (row-major contiguous), so the last
    # block dim is the full flattened width and the S axis fills sublanes.
    x2d = x.reshape(S, BD)

    # Tile size: target ~1 MiB blocks, rounded to a multiple of 8 sublane rows.
    # With double-buffered in/out tiles this stays well under even v5e's 16 MiB
    # scoped-VMEM default; the whole tensor becomes a single grid step when it
    # fits one block.
    bytes_per_row = max(1, BD * itemsize)
    rows = max(8, target_block_bytes // bytes_per_row)
    rows = (rows // 8) * 8
    tile_rows = min(S, rows)            # either a multiple of 8 or the full S
    grid = (pl.cdiv(S, tile_rows),)

    cost = pl.CostEstimate(
        flops=S * BD,
        transcendentals=0,
        bytes_accessed=2 * S * BD * itemsize + BD * itemsize,
    )

    out2d = pl.pallas_call(
        _pe_add_kernel,
        out_shape=jax.ShapeDtypeStruct((S, BD), x.dtype),
        grid_spec=pltpu.PrefetchScalarGridSpec(
            num_scalar_prefetch=0,
            grid=grid,
            in_specs=[
                pl.BlockSpec((tile_rows, BD), lambda i: (i, 0)),
                # Constant index_map -> Pallas keeps the PE slab resident
                # (no redundant per-step DMA).
                pl.BlockSpec((1, BD), lambda i: (0, 0)),
            ],
            out_specs=pl.BlockSpec((tile_rows, BD), lambda i: (i, 0)),
        ),
        compiler_params=pltpu.CompilerParams(
            dimension_semantics=("parallel",),
            # Safe on all generations (<= v7x's 64 MiB physical), raises v5e's
            # 16 MiB scoped default for headroom with the larger tiles.
            vmem_limit_bytes=32 * 1024 * 1024,
        ),
        cost_estimate=cost,
    )(x2d, pe_flat)

    return out2d.reshape(S, B, D)


# ----------------------------------- main ------------------------------------
if __name__ == "__main__":
    # Small shapes consistent with the module's forward:
    #   x: [seq_len=8, batch=2, d_model=32], y: [batch=2]
    seq_len, batch, d_model, max_len = 8, 2, 32, 64

    key = jax.random.PRNGKey(0)
    kx, ky = jax.random.split(key)
    x = jax.random.normal(kx, (seq_len, batch, d_model), dtype=jnp.float32)
    y = jax.random.randint(ky, (batch,), 0, max_len, dtype=jnp.int32)

    pe = make_positional_encoding_table(d_model, max_len)

    out = positional_encoding_forward(x, y, pe)
    out = jax.block_until_ready(out)

    # Reference check (pure JAX, eval-mode dropout == identity).
    ref = x + jnp.take(pe, y, axis=0)[None, :, :]
    assert out.shape == (seq_len, batch, d_model)
    assert jnp.allclose(out, ref, atol=1e-6, rtol=1e-6)

    print("KERNEL_OK")
</pallas_src>

<mosaic_0001>
module attributes {stable_mosaic.version = 11 : i64} {
  func.func @_pe_add_kernel(%arg0: i32, %arg1: memref<8x64xf32, #tpu.memory_space<vmem>>, %arg2: memref<1x64xf32, #tpu.memory_space<vmem>>, %arg3: memref<8x64xf32, #tpu.memory_space<vmem>>) attributes {dimension_semantics = [#tpu.dimension_semantics<parallel>], iteration_bounds = array<i64: 1>, scalar_prefetch = 0 : i64, scratch_operands = 0 : i64, tpu.core_type = #tpu.core_type<tc>, window_params = [{transform_indices = @transform_0, window_bounds = array<i64: 8, 64>}, {pipeline_mode = #tpu.pipeline_mode<synchronous>, transform_indices = @transform_1, window_bounds = array<i64: 1, 64>}, {transform_indices = @transform_2, window_bounds = array<i64: 8, 64>}]} {
    %c0 = arith.constant 0 : index
    %c0_0 = arith.constant 0 : index
    %0 = vector.load %arg1[%c0, %c0_0] : memref<8x64xf32, #tpu.memory_space<vmem>>, vector<8x64xf32>
    %c0_1 = arith.constant 0 : index
    %c0_2 = arith.constant 0 : index
    %1 = vector.load %arg2[%c0_1, %c0_2] : memref<1x64xf32, #tpu.memory_space<vmem>>, vector<1x64xf32>
    %2 = vector.broadcast %1 : vector<1x64xf32> to vector<8x64xf32>
    %3 = arith.addf %0, %2 : vector<8x64xf32>
    %c0_3 = arith.constant 0 : index
    %c0_4 = arith.constant 0 : index
    %4 = vector.load %arg3[%c0_3, %c0_4] : memref<8x64xf32, #tpu.memory_space<vmem>>, vector<8x64xf32>
    tpu.vector_store %arg3[%c0_3, %c0_4], %3 {strides = array<i32>} : memref<8x64xf32, #tpu.memory_space<vmem>>, vector<8x64xf32>,
    return
  }
  func.func @transform_0(%arg0: i32) -> (i32, i32) {
    %c0_i32 = arith.constant 0 : i32
    %c0_i32_0 = arith.constant 0 : i32
    return %arg0, %c0_i32 : i32, i32
  }
  func.func @transform_1(%arg0: i32) -> (i32, i32) {
    %c0_i32 = arith.constant 0 : i32
    %c0_i32_0 = arith.constant 0 : i32
    %c0_i32_1 = arith.constant 0 : i32
    return %c0_i32, %c0_i32_0 : i32, i32
  }
  func.func @transform_2(%arg0: i32) -> (i32, i32) {
    %c0_i32 = arith.constant 0 : i32
    %c0_i32_0 = arith.constant 0 : i32
    return %arg0, %c0_i32 : i32, i32
  }
}

</mosaic_0001>

<llo_original>
// kernel: tpu_custom_call.1
$region0: #{tpu_custom_call.1}
  #allocation0 [shape = 'u32[]', space=smem, size = 0x4, offset = 0x4, fixed_abs, tag = 'smem constant byte address 0x4 - core index']
  #allocation1 [shape = 'u32[72,128]{1,0:T(1,128)}', space=vmem, size = 0x9000, scoped, tag = 'internal scratch']
  %s0 = inlined_call_operand.hbm [shape: f32[8,64], index: 0, kind: input, shape index: {}]
  %s1 = inlined_call_operand.hbm [shape: f32[1,64], index: 1, kind: input, shape index: {}]
  %s2 = inlined_call_operand.hbm [shape: f32[8,64], index: 2, kind: output, shape index: {}]
  %s3 = sld [smem:[#allocation0]]
  $region26: #{tpu_custom_call.1} parent=0
    _
  %s5 = ssub.s32 1, %s3
  %s6 = scalar_select 0, %s5, %s3
  $region1: #{tpu_custom_call.1} parent=0
    #allocation2 [shape = 'u8[4096]{0}', space=vmem, size = 0x1000, scoped, tag = 'input window, operand 0, single buffered']
    #allocation3 [shape = 's32[1]{0}', space=sflag, size = 0x4, scoped, tag = 'scoped memory for tpu_custom_call.1']
    #allocation4 [shape = 's32[1]{0}', space=sflag, size = 0x4, scoped, tag = 'scoped memory for tpu_custom_call.1']
    #allocation5 [shape = 'u8[512]{0}', space=vmem, size = 0x400, scoped, tag = 'input window, operand 1, single buffered']
    #allocation6 [shape = 's32[1]{0}', space=sflag, size = 0x4, scoped, tag = 'scoped memory for tpu_custom_call.1']
    #allocation7 [shape = 'u8[4096]{0}', space=vmem, size = 0x1000, scoped, tag = 'output window, operand 0, single buffered']
    %7 = vsyncpa [#allocation3], 0
    %8 = vsyncpa [#allocation6], 0
    %9 = vsyncpa [#allocation4], 0
    // Predicated region
    $region2: #{tpu_custom_call.1} parent=1 // pred_check
      _
    $region3: #{tpu_custom_call.1} parent=1 // pred_check_branch
      %11 = sbr.rel (0) target = $region5
    $region4: #{tpu_custom_call.1} parent=1 // pred_region
      %13 = vsyncadd [#allocation3], 0
      %s15 = sshll.u32 %s0, 4
      %s16 = int_to_ptr.hbm [resolvable:$true] %s15
      %s17 = sshll.u32 [#allocation2], 4
      %s18 = int_to_ptr.vmem [resolvable:$true] %s17
      %20 = dma.hbm_to_vmem [thread:$0]  %s16, 128, %s18, [#allocation3]
    $region5: #{tpu_custom_call.1} parent=1 // pred_fallthru
      _
    // Predicated region
    $region6: #{tpu_custom_call.1} parent=1 // pred_check
      _
    $region7: #{tpu_custom_call.1} parent=1 // pred_check_branch
      %22 = sbr.rel (0) target = $region9
    $region8: #{tpu_custom_call.1} parent=1 // pred_region
      %24 = vsyncadd [#allocation6], 0
      %s26 = sshll.u32 %s1, 4
      %s27 = int_to_ptr.hbm [resolvable:$true] %s26
      %s28 = sshll.u32 [#allocation5], 4
      %s29 = int_to_ptr.vmem [resolvable:$true] %s28
      %31 = dma.hbm_to_vmem [thread:$0]  %s27, 16, %s29, [#allocation6]
    $region9: #{tpu_custom_call.1} parent=1 // pred_fallthru
      _
    // Predicated region
    $region10: #{tpu_custom_call.1} parent=1 // pred_check
      _
    $region11: #{tpu_custom_call.1} parent=1 // pred_check_branch
      %33 = sbr.rel (0) target = $region13
    $region12: #{tpu_custom_call.1} parent=1 // pred_region
      %35 = dma.done [#allocation3], 128
    $region13: #{tpu_custom_call.1} parent=1 // pred_fallthru
      _
    // Predicated region
    $region14: #{tpu_custom_call.1} parent=1 // pred_check
      _
    $region15: #{tpu_custom_call.1} parent=1 // pred_check_branch
      %37 = sbr.rel (0) target = $region17
    $region16: #{tpu_custom_call.1} parent=1 // pred_region
      %39 = dma.done [#allocation6], 16
    $region17: #{tpu_custom_call.1} parent=1 // pred_fallthru
      _
    %v40 = vld [vmem:[#allocation2] sm:$0xff]
    %v41 = vld [vmem:[#allocation5] sm:$0x1]
    %v43 = vperm.slane %v41, 0
    %v45 = vadd.f32 %v40, %v43
    %vm46 = vcmask 523264
    %47 = vst.msk [vmem:[#allocation7] sm:$0xff] %vm46, %v45
    // Predicated region
    $region18: #{tpu_custom_call.1} parent=1 // pred_check
      _
    $region19: #{tpu_custom_call.1} parent=1 // pred_check_branch
      %49 = sbr.rel (0) target = $region21
    $region20: #{tpu_custom_call.1} parent=1 // pred_region
      %51 = vsyncadd [#allocation4], 0
      %s53 = sshll.u32 [#allocation7], 4
      %s54 = int_to_ptr.vmem [resolvable:$true] %s53
      %s55 = sshll.u32 %s2, 4
      %s56 = int_to_ptr.hbm [resolvable:$true] %s55
      %58 = dma.vmem_to_hbm [thread:$0]  %s54, 128, %s56, [#allocation4]
    $region21: #{tpu_custom_call.1} parent=1 // pred_fallthru
      _
    // Predicated region
    $region22: #{tpu_custom_call.1} parent=1 // pred_check
      _
    $region23: #{tpu_custom_call.1} parent=1 // pred_check_branch
      %60 = sbr.rel (0) target = $region25
    $region24: #{tpu_custom_call.1} parent=1 // pred_region
      %62 = dma.done [#allocation4], 128
    $region25: #{tpu_custom_call.1} parent=1 // pred_fallthru
      _
    %63 = vsyncpa [#allocation3], 1
    %64 = vsyncpa [#allocation6], 1
    %65 = vsyncpa [#allocation4], 1

</llo_original>
